<compile_context>
chip_gen: v7x
topology: tpu7x:2x2x1
jax: 0.10.0
libtpu: 0.0.40
codegen_flags: <defaults>
</compile_context>

<pallas_src>
import functools

import jax
import jax.numpy as jnp
from jax.experimental import pallas as pl
from jax.experimental.pallas import tpu as pltpu

EPS = 1e-12


def _round_up(x, m):
    return ((x + m - 1) // m) * m


def _embeddings_kernel(ids_ref, tbl_ref, g_ref, b_ref, out_ref):
    # ids_ref : (TOK, 2) int32  -- col 0: token id in [0, V)
    #                              col 1: V + position id  (in [V, V+P))
    # tbl_ref : (V+P, H) f32    -- rows [0, V) word table, rows [V, V+P) pos table
    # g_ref / b_ref : (1, H) f32
    # out_ref : (TOK, H) f32
    TOK = out_ref.shape[0]
    H = out_ref.shape[1]
    VP = tbl_ref.shape[0]

    tok_ids = ids_ref[:, 0:1]          # (TOK, 1)
    pos_ids = ids_ref[:, 1:2]          # (TOK, 1), already offset by V

    # Fused word+position gather: one "two-hot" selection matrix, one MXU
    # matmul.  The id ranges are disjoint, so the OR equals the sum of the two
    # one-hots and the product is exactly word_row + pos_row (exact selection,
    # numerically identical to a row gather).
    iota = jax.lax.broadcasted_iota(jnp.int32, (TOK, VP), 1)
    twohot = ((iota == tok_ids) | (iota == pos_ids)).astype(jnp.float32)
    x = jnp.dot(twohot, tbl_ref[...],
                preferred_element_type=jnp.float32)          # (TOK, H)

    # LayerNorm with one-pass statistics: both reductions are independent and
    # issue back-to-back on the XLU; rsqrt goes to the EUP slot.
    inv_h = jnp.float32(1.0 / H)
    mean = jnp.sum(x, axis=-1, keepdims=True) * inv_h
    ex2 = jnp.sum(x * x, axis=-1, keepdims=True) * inv_h
    var = jnp.maximum(ex2 - mean * mean, 0.0)
    y = (x - mean) * jax.lax.rsqrt(var + EPS)
    out_ref[...] = (g_ref[...] * y + b_ref[...]).astype(out_ref.dtype)


@functools.partial(jax.jit, static_argnames=("tok_tile",))
def embeddings_forward(input_ids, word_emb, pos_emb, gamma, beta,
                       *, tok_tile=512):
    B, S = input_ids.shape
    V, H = word_emb.shape
    P = pos_emb.shape[0]
    if S > P:
        raise ValueError(
            f"sequence length {S} exceeds max_position_size {P}")

    N = B * S
    tok_tile = _round_up(tok_tile, 8)
    TOK = min(tok_tile, _round_up(N, 8))
    # Keep >= 2 grid steps so the "parallel" axis can shard across both v7x
    # TensorCores (one grid step would idle the second core).
    if _round_up(N, TOK) // TOK < 2 and TOK > 8:
        TOK = _round_up(max(_round_up(N, 8) // 2, 8), 8)
    N_pad = _round_up(N, TOK)
    num_tiles = N_pad // TOK

    # Merged (token, V + position) id pairs; clamp token ids for OOB safety.
    tok_flat = jnp.clip(input_ids.reshape(-1).astype(jnp.int32), 0, V - 1)
    tok_flat = jnp.pad(tok_flat, (0, N_pad - N))
    pos_flat = (jnp.arange(N_pad, dtype=jnp.int32) % S) + V
    ids2 = jnp.stack([tok_flat, pos_flat], axis=-1)          # (N_pad, 2)

    # Fused (V+P, H) table, VMEM-resident for the whole grid (constant
    # index_map -> loaded once).  For production vocab this must become the
    # streaming HBM row-gather path (see TODO above).
    tbl = jnp.concatenate([word_emb, pos_emb], axis=0)
    gamma2d = gamma.reshape(1, H).astype(jnp.float32)
    beta2d = beta.reshape(1, H).astype(jnp.float32)

    # Explicit scoped-VMEM budget: resident table + double-buffered streaming
    # blocks + headroom, floored at the v6e/v7x default (32 MiB), capped at
    # v7x physical (64 MiB).
    resident_bytes = (V + P) * H * 4 + 2 * H * 4
    stream_bytes = 2 * (TOK * H * 4 + TOK * 2 * 4)
    vmem_limit = int(min(max(2 * (resident_bytes + stream_bytes) + (4 << 20),
                             32 << 20), 64 << 20))

    out = pl.pallas_call(
        _embeddings_kernel,
        out_shape=jax.ShapeDtypeStruct((N_pad, H), jnp.float32),
        grid_spec=pltpu.PrefetchScalarGridSpec(
            num_scalar_prefetch=0,
            grid=(num_tiles,),
            in_specs=[
                pl.BlockSpec((TOK, 2), lambda t: (t, 0)),      # merged ids
                pl.BlockSpec((V + P, H), lambda t: (0, 0)),    # fused table (resident)
                pl.BlockSpec((1, H), lambda t: (0, 0)),        # gamma (resident)
                pl.BlockSpec((1, H), lambda t: (0, 0)),        # beta (resident)
            ],
            out_specs=pl.BlockSpec((TOK, H), lambda t: (t, 0)),
        ),
        compiler_params=pltpu.CompilerParams(
            dimension_semantics=("parallel",),
            vmem_limit_bytes=vmem_limit),
    )(ids2, tbl, gamma2d, beta2d)

    return out[:N].reshape(B, S, H)


def reference_forward(input_ids, word_emb, pos_emb, gamma, beta):
    B, S = input_ids.shape
    pos_ids = jnp.arange(S, dtype=jnp.int32)[None, :].repeat(B, axis=0)
    x = word_emb[input_ids] + pos_emb[pos_ids]
    u = jnp.mean(x, axis=-1, keepdims=True)
    s = jnp.mean((x - u) ** 2, axis=-1, keepdims=True)
    x = (x - u) / jnp.sqrt(s + EPS)
    return gamma * x + beta


if __name__ == "__main__":
    # Small shapes consistent with the module.
    vocab_size = 32
    hidden_size = 128
    max_position_size = 16
    batch, seq = 2, 8

    key = jax.random.PRNGKey(0)
    k_ids, k_w, k_p = jax.random.split(key, 3)

    input_ids = jax.random.randint(k_ids, (batch, seq), 0, vocab_size,
                                   dtype=jnp.int32)
    word_emb = jax.random.normal(k_w, (vocab_size, hidden_size),
                                 dtype=jnp.float32)
    pos_emb = jax.random.normal(k_p, (max_position_size, hidden_size),
                                dtype=jnp.float32)
    gamma = jnp.ones((hidden_size,), dtype=jnp.float32)   # LayerNorm.gamma init
    beta = jnp.zeros((hidden_size,), dtype=jnp.float32)   # LayerNorm.beta init

    out = embeddings_forward(input_ids, word_emb, pos_emb, gamma, beta)
    out = jax.block_until_ready(out)

    ref = reference_forward(input_ids, word_emb, pos_emb, gamma, beta)
    assert out.shape == (batch, seq, hidden_size)
    # One-pass variance + EUP rsqrt differ from the reference's two-pass /
    # 1/sqrt path by a few ULPs; tolerance reflects that.
    assert jnp.allclose(out, ref, atol=1e-4, rtol=1e-4), "mismatch vs reference"

    print("KERNEL_OK")
</pallas_src>

<mosaic_0001>
module attributes {stable_mosaic.version = 11 : i64} {
  func.func @_embeddings_kernel(%arg0: i32, %arg1: memref<8x2xi32, #tpu.memory_space<vmem>>, %arg2: memref<48x128xf32, #tpu.memory_space<vmem>>, %arg3: memref<1x128xf32, #tpu.memory_space<vmem>>, %arg4: memref<1x128xf32, #tpu.memory_space<vmem>>, %arg5: memref<8x128xf32, #tpu.memory_space<vmem>>) attributes {dimension_semantics = [#tpu.dimension_semantics<parallel>], iteration_bounds = array<i64: 2>, scalar_prefetch = 0 : i64, scratch_operands = 0 : i64, tpu.core_type = #tpu.core_type<tc>, window_params = [{transform_indices = @transform_0, window_bounds = array<i64: 8, 2>}, {pipeline_mode = #tpu.pipeline_mode<synchronous>, transform_indices = @transform_1, window_bounds = array<i64: 48, 128>}, {pipeline_mode = #tpu.pipeline_mode<synchronous>, transform_indices = @transform_2, window_bounds = array<i64: 1, 128>}, {pipeline_mode = #tpu.pipeline_mode<synchronous>, transform_indices = @transform_3, window_bounds = array<i64: 1, 128>}, {transform_indices = @transform_4, window_bounds = array<i64: 8, 128>}]} {
    %c0 = arith.constant 0 : index
    %c0_0 = arith.constant 0 : index
    %0 = vector.load %arg1[%c0, %c0_0] : memref<8x2xi32, #tpu.memory_space<vmem>>, vector<8x1xi32>
    %c0_1 = arith.constant 0 : index
    %c1 = arith.constant 1 : index
    %1 = vector.load %arg1[%c0_1, %c1] : memref<8x2xi32, #tpu.memory_space<vmem>>, vector<8x1xi32>
    %2 = tpu.iota {dimensions = array<i32: 1>} : vector<8x48xi32>
    %3 = vector.broadcast %0 : vector<8x1xi32> to vector<8x48xi32>
    %4 = arith.cmpi eq, %2, %3 : vector<8x48xi32>
    %5 = vector.broadcast %1 : vector<8x1xi32> to vector<8x48xi32>
    %6 = arith.cmpi eq, %2, %5 : vector<8x48xi32>
    %7 = arith.ori %4, %6 : vector<8x48xi1>
    %8 = arith.extui %7 : vector<8x48xi1> to vector<8x48xi32>
    %9 = arith.sitofp %8 : vector<8x48xi32> to vector<8x48xf32>
    %c0_2 = arith.constant 0 : index
    %c0_3 = arith.constant 0 : index
    %10 = vector.load %arg2[%c0_2, %c0_3] : memref<48x128xf32, #tpu.memory_space<vmem>>, vector<48x128xf32>
    %cst = arith.constant dense<0.000000e+00> : vector<8x128xf32>
    %11 = tpu.matmul %9, %10, %cst {dimension_numbers = #tpu.dot_dimension_numbers<[1], [0], [0], [1], [0, 0, 1, 1], [], []>} : vector<8x48xf32>, vector<48x128xf32>, vector<8x128xf32> -> vector<8x128xf32>
    %cst_4 = arith.constant dense<0.000000e+00> : vector<8xf32>
    %12 = vector.multi_reduction <add>, %11, %cst_4 [1] : vector<8x128xf32> to vector<8xf32>
    %13 = vector.shape_cast %12 : vector<8xf32> to vector<8x1xf32>
    %cst_5 = arith.constant 7.812500e-03 : f32
    %14 = vector.broadcast %cst_5 : f32 to vector<8x1xf32>
    %15 = arith.mulf %13, %14 : vector<8x1xf32>
    %16 = arith.mulf %11, %11 : vector<8x128xf32>
    %cst_6 = arith.constant dense<0.000000e+00> : vector<8xf32>
    %17 = vector.multi_reduction <add>, %16, %cst_6 [1] : vector<8x128xf32> to vector<8xf32>
    %18 = vector.shape_cast %17 : vector<8xf32> to vector<8x1xf32>
    %cst_7 = arith.constant 7.812500e-03 : f32
    %19 = vector.broadcast %cst_7 : f32 to vector<8x1xf32>
    %20 = arith.mulf %18, %19 : vector<8x1xf32>
    %21 = arith.mulf %15, %15 : vector<8x1xf32>
    %22 = arith.subf %20, %21 : vector<8x1xf32>
    %cst_8 = arith.constant 0.000000e+00 : f32
    %23 = vector.broadcast %cst_8 : f32 to vector<8x1xf32>
    %24 = arith.maximumf %22, %23 : vector<8x1xf32>
    %25 = vector.broadcast %15 : vector<8x1xf32> to vector<8x128xf32>
    %26 = arith.subf %11, %25 : vector<8x128xf32>
    %cst_9 = arith.constant 9.99999996E-13 : f32
    %27 = vector.broadcast %cst_9 : f32 to vector<8x1xf32>
    %28 = arith.addf %24, %27 : vector<8x1xf32>
    %29 = math.rsqrt %28 : vector<8x1xf32>
    %30 = vector.broadcast %29 : vector<8x1xf32> to vector<8x128xf32>
    %31 = arith.mulf %26, %30 : vector<8x128xf32>
    %c0_10 = arith.constant 0 : index
    %c0_11 = arith.constant 0 : index
    %32 = vector.load %arg3[%c0_10, %c0_11] : memref<1x128xf32, #tpu.memory_space<vmem>>, vector<1x128xf32>
    %33 = vector.broadcast %32 : vector<1x128xf32> to vector<8x128xf32>
    %34 = arith.mulf %33, %31 : vector<8x128xf32>
    %c0_12 = arith.constant 0 : index
    %c0_13 = arith.constant 0 : index
    %35 = vector.load %arg4[%c0_12, %c0_13] : memref<1x128xf32, #tpu.memory_space<vmem>>, vector<1x128xf32>
    %36 = vector.broadcast %35 : vector<1x128xf32> to vector<8x128xf32>
    %37 = arith.addf %34, %36 : vector<8x128xf32>
    %c0_14 = arith.constant 0 : index
    %c0_15 = arith.constant 0 : index
    %38 = vector.load %arg5[%c0_14, %c0_15] : memref<8x128xf32, #tpu.memory_space<vmem>>, vector<8x128xf32>
    tpu.vector_store %arg5[%c0_14, %c0_15], %37 {strides = array<i32>} : memref<8x128xf32, #tpu.memory_space<vmem>>, vector<8x128xf32>,
    return
  }
  func.func @transform_0(%arg0: i32) -> (i32, i32) {
    %c0_i32 = arith.constant 0 : i32
    %c0_i32_0 = arith.constant 0 : i32
    return %arg0, %c0_i32 : i32, i32
  }
  func.func @transform_1(%arg0: i32) -> (i32, i32) {
    %c0_i32 = arith.constant 0 : i32
    %c0_i32_0 = arith.constant 0 : i32
    %c0_i32_1 = arith.constant 0 : i32
    return %c0_i32, %c0_i32_0 : i32, i32
  }
  func.func @transform_2(%arg0: i32) -> (i32, i32) {
    %c0_i32 = arith.constant 0 : i32
    %c0_i32_0 = arith.constant 0 : i32
    %c0_i32_1 = arith.constant 0 : i32
    return %c0_i32, %c0_i32_0 : i32, i32
  }
  func.func @transform_3(%arg0: i32) -> (i32, i32) {
    %c0_i32 = arith.constant 0 : i32
    %c0_i32_0 = arith.constant 0 : i32
    %c0_i32_1 = arith.constant 0 : i32
    return %c0_i32, %c0_i32_0 : i32, i32
  }
  func.func @transform_4(%arg0: i32) -> (i32, i32) {
    %c0_i32 = arith.constant 0 : i32
    %c0_i32_0 = arith.constant 0 : i32
    return %arg0, %c0_i32 : i32, i32
  }
}

</mosaic_0001>

<llo_original>
// kernel: embeddings_forward.1
$region0: #{embeddings_forward.1}
  #allocation0 [shape = 'u32[]', space=smem, size = 0x4, offset = 0x4, fixed_abs, tag = 'smem constant byte address 0x4 - core index']
  #allocation1 [shape = 'u32[144,128]{1,0:T(1,128)}', space=vmem, size = 0x12000, scoped, tag = 'internal scratch']
  %s0 = inlined_call_operand.vmem [shape: s32[16,2], index: 0, kind: input, shape index: {}]
  %s1 = inlined_call_operand.vmem [shape: f32[48,128], index: 1, kind: input, shape index: {}]
  %s2 = inlined_call_operand.vmem [shape: f32[1,128], index: 2, kind: input, shape index: {}]
  %s3 = inlined_call_operand.vmem [shape: f32[1,128], index: 3, kind: input, shape index: {}]
  %s4 = inlined_call_operand.hbm [shape: f32[16,128], index: 4, kind: output, shape index: {}]
  %s5 = sld [smem:[#allocation0]]
  $region49: #{embeddings_forward.1} parent=0
    _
  %s7 = ssub.s32 1, %s5
  %s8 = scalar_select 0, %s7, %s5
  $region1: #{embeddings_forward.1} parent=0
    #allocation2 [shape = 'u8[8192]{0}', space=vmem, size = 0x2000, scoped, tag = 'output window, operand 0']
    #allocation3 [shape = 's32[2]{0}', space=sflag, size = 0x8, scoped, tag = 'scoped memory for embeddings_forward.1']
    %9 = vsyncpa [#allocation3], 0
    %s10 = scalar_lea.sflag [#allocation3], 1
    %11 = vsyncpa %s10, 0
    loop: start=0, step=1, limit=4
    $region2: #{embeddings_forward.1} parent=1 // loop_pre_header
      _
    $region3: #{embeddings_forward.1} parent=1 // loop_header
      %s13 = sphi 0, %s17
      %p14 = scmp.ge.s32.totalorder %s13, 4
      %s23 = sphi 0, %s25
      %s26 = sphi 0, %s23
      %s27 = sphi 0, %s26
      %s43 = sphi 0, %s27
      %s47 = sphi 0, %s47
      %s49 = sphi 0, %s47
      %s50 = sphi 0, %s49
      %s64 = sphi 0, %s50
      %s68 = sphi 0, %s68
      %s70 = sphi 0, %s68
      %s71 = sphi 0, %s70
      %s85 = sphi 0, %s71
      %s89 = sphi 0, %s89
      %s91 = sphi 0, %s89
      %s92 = sphi 0, %s91
      %s106 = sphi 0, %s92
      %s112 = sphi 0, %s114
      %s115 = sphi 0, %s112
      %s116 = sphi 0, %s115
      %s132 = sphi 0, %s116
    $region4: #{embeddings_forward.1} parent=1 // loop_header_branch
      %16 = sbr.rel (%p14) target = $region8
    $region5: #{embeddings_forward.1} parent=1 // loop_body
      %s18 = ssub.s32 %s13, 1
      %s19 = ssub.s32 %s13, 2
      %s20 = sadd.s32 %s13, 1
      %s21 = ssub.s32 %s13, %s20
      %p22 = scmp.eq.s32.totalorder %s21, 0
      %s24 = sadd.s32 %s23, 1
      %s25 = scalar_select %p22, %s23, %s24
      %p28 = pneg %p22
      %p29 = scmp.eq.s32.totalorder %s13, 1
      %p30 = por %p28, %p29
      %p31 = scmp.ne.s32.totalorder %s23, %s26
      %p32 = scmp.eq.s32.totalorder %s13, 0
      %p33 = por %p31, %p32
      %p34 = scmp.ne.s32.totalorder %s23, %s26
      %p35 = scmp.eq.s32.totalorder %s18, 1
      %p36 = por %p34, %p35
      %p37 = scmp.ne.s32.totalorder %s26, %s27
      %p38 = scmp.eq.s32.totalorder %s18, 0
      %p39 = por %p37, %p38
      %p40 = scmp.ne.s32.totalorder %s26, %s27
      %p41 = scmp.eq.s32.totalorder %s19, 1
      %p42 = por %p40, %p41
      %p44 = scmp.ne.s32.totalorder %s27, %s43
      %p45 = scmp.eq.s32.totalorder %s19, 0
      %p46 = por %p44, %p45
      %s48 = sadd.s32 %s47, 1
      %p51 = scmp.eq.s32.totalorder %s13, 1
      %p52 = scmp.ne.s32.totalorder %s47, %s49
      %p53 = scmp.eq.s32.totalorder %s13, 0
      %p54 = por %p52, %p53
      %p55 = scmp.ne.s32.totalorder %s47, %s49
      %p56 = scmp.eq.s32.totalorder %s18, 1
      %p57 = por %p55, %p56
      %p58 = scmp.ne.s32.totalorder %s49, %s50
      %p59 = scmp.eq.s32.totalorder %s18, 0
      %p60 = por %p58, %p59
      %p61 = scmp.ne.s32.totalorder %s49, %s50
      %p62 = scmp.eq.s32.totalorder %s19, 1
      %p63 = por %p61, %p62
      %p65 = scmp.ne.s32.totalorder %s50, %s64
      %p66 = scmp.eq.s32.totalorder %s19, 0
      %p67 = por %p65, %p66
      %s69 = sadd.s32 %s68, 1
      %p72 = scmp.eq.s32.totalorder %s13, 1
      %p73 = scmp.ne.s32.totalorder %s68, %s70
      %p74 = scmp.eq.s32.totalorder %s13, 0
      %p75 = por %p73, %p74
      %p76 = scmp.ne.s32.totalorder %s68, %s70
      %p77 = scmp.eq.s32.totalorder %s18, 1
      %p78 = por %p76, %p77
      %p79 = scmp.ne.s32.totalorder %s70, %s71
      %p80 = scmp.eq.s32.totalorder %s18, 0
      %p81 = por %p79, %p80
      %p82 = scmp.ne.s32.totalorder %s70, %s71
      %p83 = scmp.eq.s32.totalorder %s19, 1
      %p84 = por %p82, %p83
      %p86 = scmp.ne.s32.totalorder %s71, %s85
      %p87 = scmp.eq.s32.totalorder %s19, 0
      %p88 = por %p86, %p87
      %s90 = sadd.s32 %s89, 1
      %p93 = scmp.eq.s32.totalorder %s13, 1
      %p94 = scmp.ne.s32.totalorder %s89, %s91
      %p95 = scmp.eq.s32.totalorder %s13, 0
      %p96 = por %p94, %p95
      %p97 = scmp.ne.s32.totalorder %s89, %s91
      %p98 = scmp.eq.s32.totalorder %s18, 1
      %p99 = por %p97, %p98
      %p100 = scmp.ne.s32.totalorder %s91, %s92
      %p101 = scmp.eq.s32.totalorder %s18, 0
      %p102 = por %p100, %p101
      %p103 = scmp.ne.s32.totalorder %s91, %s92
      %p104 = scmp.eq.s32.totalorder %s19, 1
      %p105 = por %p103, %p104
      %p107 = scmp.ne.s32.totalorder %s92, %s106
      %p108 = scmp.eq.s32.totalorder %s19, 0
      %p109 = por %p107, %p108
      %s110 = ssub.s32 %s13, %s20
      %p111 = scmp.eq.s32.totalorder %s110, 0
      %s113 = sadd.s32 %s112, 1
      %s114 = scalar_select %p111, %s112, %s113
      %p117 = pneg %p111
      %p118 = scmp.eq.s32.totalorder %s13, 1
      %p119 = por %p117, %p118
      %p120 = scmp.ne.s32.totalorder %s112, %s115
      %p121 = scmp.eq.s32.totalorder %s13, 0
      %p122 = por %p120, %p121
      %p123 = scmp.ne.s32.totalorder %s112, %s115
      %p124 = scmp.eq.s32.totalorder %s18, 1
      %p125 = por %p123, %p124
      %p126 = scmp.ne.s32.totalorder %s115, %s116
      %p127 = scmp.eq.s32.totalorder %s18, 0
      %p128 = por %p126, %p127
      %p129 = scmp.ne.s32.totalorder %s115, %s116
      %p130 = scmp.eq.s32.totalorder %s19, 1
      %p131 = por %p129, %p130
      %p133 = scmp.ne.s32.totalorder %s116, %s132
      %p134 = scmp.eq.s32.totalorder %s19, 0
      %p135 = por %p133, %p134
      %p136 = scmp.le.s32.totalorder 1, %s13
      %p137 = scmp.lt.s32.totalorder %s13, 3
      %p138 = pnand %p136, %p137
      %p139 = pneg %p138
      // Predicated region
      $region9: #{embeddings_forward.1} parent=5 // pred_check
        _
      $region10: #{embeddings_forward.1} parent=5 // pred_check_branch
        %141 = sbr.rel (%p138) target = $region12
      $region11: #{embeddings_forward.1} parent=5 // pred_region
        %s142 = ssub.s32 %s13, 1
        // Predicated region
        $region13: #{embeddings_forward.1} parent=11 // pred_check
          %p143 = pneg %p60
        $region14: #{embeddings_forward.1} parent=11 // pred_check_branch
          %145 = sbr.rel (%p143) target = $region16
        $region15: #{embeddings_forward.1} parent=11 // pred_region
          _
        $region16: #{embeddings_forward.1} parent=11 // pred_fallthru
          _
        // Predicated region
        $region17: #{embeddings_forward.1} parent=11 // pred_check
          %p146 = pneg %p81
        $region18: #{embeddings_forward.1} parent=11 // pred_check_branch
          %148 = sbr.rel (%p146) target = $region20
        $region19: #{embeddings_forward.1} parent=11 // pred_region
          _
        $region20: #{embeddings_forward.1} parent=11 // pred_fallthru
          _
        // Predicated region
        $region21: #{embeddings_forward.1} parent=11 // pred_check
          %p149 = pneg %p102
        $region22: #{embeddings_forward.1} parent=11 // pred_check_branch
          %151 = sbr.rel (%p149) target = $region24
        $region23: #{embeddings_forward.1} parent=11 // pred_region
          _
        $region24: #{embeddings_forward.1} parent=11 // pred_fallthru
          _
      $region12: #{embeddings_forward.1} parent=5 // pred_fallthru
        _
      %p152 = scmp.lt.s32.totalorder %s13, 2
      // Predicated region
      $region25: #{embeddings_forward.1} parent=5 // pred_check
        %p153 = pneg %p152
      $region26: #{embeddings_forward.1} parent=5 // pred_check_branch
        %155 = sbr.rel (%p153) target = $region28
      $region27: #{embeddings_forward.1} parent=5 // pred_region
        // Predicated region
        $region29: #{embeddings_forward.1} parent=27 // pred_check
          %p156 = pneg %p33
        $region30: #{embeddings_forward.1} parent=27 // pred_check_branch
          %158 = sbr.rel (%p156) target = $region32
        $region31: #{embeddings_forward.1} parent=27 // pred_region
          %p159 = scmp.lt.s32.totalorder %s13, 1
          %s160 = scalar_select %p159, %s13, 1
          %s161 = smul.addr %s160, 8
          %s162 = scalar_lea.vmem %s0, %s161
        $region32: #{embeddings_forward.1} parent=27 // pred_fallthru
          _
      $region28: #{embeddings_forward.1} parent=5 // pred_fallthru
        _
      %p163 = scmp.le.s32.totalorder 1, %s13
      %p164 = scmp.lt.s32.totalorder %s13, 3
      %p165 = pnand %p163, %p164
      %p166 = pneg %p165
      // Predicated region
      $region33: #{embeddings_forward.1} parent=5 // pred_check
        _
      $region34: #{embeddings_forward.1} parent=5 // pred_check_branch
        %168 = sbr.rel (%p165) target = $region36
      $region35: #{embeddings_forward.1} parent=5 // pred_region
        %s169 = ssub.s32 %s13, 1
        %p170 = scmp.lt.s32.totalorder %s18, 1
        %s171 = scalar_select %p170, %s18, 1
        %s172 = smul.addr %s171, 8
        %s173 = scalar_lea.vmem %s0, %s172
        %p174 = pneg %p39
        %p175 = pneg %p36
        %p176 = pneg %p60
        %p177 = pneg %p57
        %p178 = pneg %p81
        %p179 = pneg %p78
        %p180 = pneg %p102
        %p181 = pneg %p99
        %p182 = pneg %p128
        %p183 = pneg %p125
        %s184 = sand.u32 %s115, 1
        %s185 = scalar_lea.sflag [#allocation3], %s184
        %s186 = sand.u32 %s115, 1
        %s187 = smul.addr %s186, 8
        %s188 = scalar_lea.vmem [#allocation2], %s187
        %p189 = scmp.lt.s32.totalorder %s18, 1
        %s190 = scalar_select %p189, %s18, 1
        %s191 = smul.addr %s190, 8
        %s192 = scalar_lea.vmem %s0, %s191
        %v193 = vld [vmem:[%s192] sm:$0xff]
        %v194 = vlaneseq
        %v195 = vand.u32 %v194, 127
        %196 = vset.pattern.permute.xlu0 0
        %197 = vperm.xlu0 %196, %v193
        %v198 = vpop.permute.xlu0 %197
        %vm199 = vcmp.eq.s32.totalorder %v195, %v198
        %200 = vset.pattern.permute.xlu0 1
        %201 = vperm.xlu0 %200, %v193
        %v202 = vpop.permute.xlu0 %201
        %vm203 = vcmp.eq.s32.totalorder %v195, %v202
        %vm204 = vmor %vm199, %vm203
        %v205 = vsel %vm204, 1, 0
        %v206 = vcvt.s32.f32 %v205
        %v207 = vld [vmem:[%s1] sm:$0xff]
        %v208 = vld [vmem:[%s1 + $0x8] sm:$0xff]
        %v209 = vld [vmem:[%s1 + $0x10] sm:$0xff]
        %v210 = vld [vmem:[%s1 + $0x18] sm:$0xff]
        %v211 = vld [vmem:[%s1 + $0x20] sm:$0xff]
        %v212 = vld [vmem:[%s1 + $0x28] sm:$0xff]
        %vm213 = vcmask 392192
        %v215 = vsel %vm213, %v206, 0
        %217 = vmatprep.subr.mxu0 0.0
        %218 = vmatpush1.msra.mxu0 %v207
        %219 = vmatprep.subr.mxu0 0.0
        %220 = vmatpush1.msra.mxu0 %v208
        %221 = vmatprep.subr.mxu0 0.0
        %222 = vmatpush1.msra.mxu0 %v209
        %223 = vmatprep.subr.mxu0 0.0
        %224 = vmatpush1.msra.mxu0 %v210
        %225 = vmatprep.subr.mxu0 0.0
        %226 = vmatpush1.msra.mxu0 %v211
        %227 = vmatprep.subr.mxu0 0.0
        %228 = vmatpush1.msra.mxu0 %v212
        %229 = vmatprep.subr.mxu0 0.0
        %230 = vmatpush1.msra.mxu0 0.0
        %231 = vmatprep.subr.mxu0 0.0
        %232 = vmatpush1.msra.mxu0 0.0
        %233 = vmatprep.subr.mxu0 0.0
        %234 = vmatpush1.msra.mxu0 0.0
        %235 = vmatprep.subr.mxu0 0.0
        %236 = vmatpush1.msra.mxu0 0.0
        %237 = vmatprep.subr.mxu0 0.0
        %238 = vmatpush1.msra.mxu0 0.0
        %239 = vmatprep.subr.mxu0 0.0
        %240 = vmatpush1.msra.mxu0 0.0
        %241 = vmatprep.subr.mxu0 0.0
        %242 = vmatpush1.msra.mxu0 0.0
        %243 = vmatprep.subr.mxu0 0.0
        %244 = vmatpush1.msra.mxu0 0.0
        %245 = vmatprep.subr.mxu0 0.0
        %246 = vmatpush1.msra.mxu0 0.0
        %247 = vmatprep.subr.mxu0 0.0
        %248 = vmatpush1.msra.mxu0 0.0
        %249 = vmatprep.subr.mxu0 0.0
        %250 = vmatpush1.msra.mxu0 0.0
        %251 = vmatprep.subr.mxu0 0.0
        %252 = vmatpush1.msra.mxu0 0.0
        %253 = vmatprep.subr.mxu0 0.0
        %254 = vmatpush1.msra.mxu0 0.0
        %255 = vmatprep.subr.mxu0 0.0
        %256 = vmatpush1.msra.mxu0 0.0
        %257 = vmatprep.subr.mxu0 0.0
        %258 = vmatpush1.msra.mxu0 0.0
        %259 = vmatprep.subr.mxu0 0.0
        %260 = vmatpush1.msra.mxu0 0.0
        %261 = vmatprep.subr.mxu0 0.0
        %262 = vmatpush1.msra.mxu0 0.0
        %263 = vmatprep.subr.mxu0 0.0
        %264 = vmatpush1.msra.mxu0 0.0
        %265 = vmatprep.subr.mxu0 0.0
        %266 = vmatpush1.msra.mxu0 0.0
        %267 = vmatprep.subr.mxu0 0.0
        %268 = vmatpush1.msra.mxu0 0.0
        %269 = vmatprep.subr.mxu0 0.0
        %270 = vmatpush1.msra.mxu0 0.0
        %271 = vmatprep.subr.mxu0 0.0
        %272 = vmatpush1.msra.mxu0 0.0
        %273 = vmatprep.subr.mxu0 0.0
        %274 = vmatpush1.msra.mxu0 0.0
        %275 = vmatprep.subr.mxu0 0.0
        %276 = vmatpush1.msra.mxu0 0.0
        %277 = vmatprep.subr.mxu0 0.0
        %278 = vmatpush1.msra.mxu0 0.0
        %279 = vmatprep.subr.mxu0 0.0
        %280 = vmatpush1.msra.mxu0 0.0
        %281 = vmatprep.mubr.f32.mxu0 0.0
        %282 = vmatmul.mubr.f32.gmra.mrb[0].mxu0 %v215
        %v283 = vpop.f32.mrb[0].mxu0
        %v284 = vadd.f32 0.0, %v283
        %v285 = vpop.f32.mrb[0].mxu0
        %286 = vdwg.mxu0
        %287 = vadd.xlane.f32.xlu0 %v284
        %v288 = vpop.xlane.xlu0 %287
        %v289 = vmul.f32 %v288, 0.0078125
        %v290 = vmul.f32 %v284, %v284
        %291 = vadd.xlane.f32.xlu0 %v290
        %v292 = vpop.xlane.xlu0 %291
        %v293 = vmul.f32 %v292, 0.0078125
        %v294 = vmul.f32 %v289, %v289
        %v295 = vsub.f32 %v293, %v294
        %v296 = vmax.f32 %v295, 0.0
        %v297 = vsub.f32 %v284, %v289
        %v298 = vadd.f32 %v296, 1e-12
        %v299 = vrsqrt.pop %v298
        %v300 = vmul.f32 %v297, %v299
        %v301 = vld [vmem:[%s2] sm:$0x1]
        %v303 = vlaneseq
        %v304 = vshrl.u32 %v303, 7
        %v305 = vsub.s32 0, %v304
        %v306 = vrot.slane %v301, %v305
        %v308 = vmul.f32 %v306, %v300
        %v309 = vld [vmem:[%s3] sm:$0x1]
        %v311 = vlaneseq
        %v312 = vshrl.u32 %v311, 7
        %v313 = vsub.s32 0, %v312
        %v314 = vrot.slane %v309, %v313
        %v316 = vadd.f32 %v308, %v314
        %317 = vst [vmem:[%s188] sm:$0xff] %v316
        %s318 = sand.u32 %s115, 1
        %s319 = scalar_lea.sflag [#allocation3], %s318
        %s320 = sand.u32 %s115, 1
        %s321 = smul.addr %s320, 8
        %s322 = scalar_lea.vmem [#allocation2], %s321
        // Predicated region
        $region37: #{embeddings_forward.1} parent=35 // pred_check
          %p323 = pneg %p125
        $region38: #{embeddings_forward.1} parent=35 // pred_check_branch
          %325 = sbr.rel (%p323) target = $region40
        $region39: #{embeddings_forward.1} parent=35 // pred_region
          %s327 = ssub.s32 128, 128
          %328 = vsyncadd %s319, %s327
          %s329 = smul.addr %s18, 128
          %s330 = scalar_lea.hbm %s4, %s329
          %s332 = sshll.u32 %s322, 4
          %s333 = int_to_ptr.vmem [resolvable:$true] %s332
          %335 = dma.vmem_to_hbm [thread:$0]  %s333, 128, %s330, %s319
        $region40: #{embeddings_forward.1} parent=35 // pred_fallthru
          _
      $region36: #{embeddings_forward.1} parent=5 // pred_fallthru
        _
      %p336 = scmp.le.s32.totalorder 2, %s13
      // Predicated region
      $region41: #{embeddings_forward.1} parent=5 // pred_check
        %p337 = pneg %p336
      $region42: #{embeddings_forward.1} parent=5 // pred_check_branch
        %339 = sbr.rel (%p337) target = $region44
      $region43: #{embeddings_forward.1} parent=5 // pred_region
        %s340 = ssub.s32 %s13, 2
        // Predicated region
        $region45: #{embeddings_forward.1} parent=43 // pred_check
          %p341 = pneg %p131
        $region46: #{embeddings_forward.1} parent=43 // pred_check_branch
          %343 = sbr.rel (%p341) target = $region48
        $region47: #{embeddings_forward.1} parent=43 // pred_region
          %s344 = sand.u32 %s116, 1
          %s345 = scalar_lea.sflag [#allocation3], %s344
          %s346 = sand.u32 %s116, 1
          %s347 = smul.addr %s346, 8
          %s348 = scalar_lea.vmem [#allocation2], %s347
          %349 = dma.done %s345, 128
        $region48: #{embeddings_forward.1} parent=43 // pred_fallthru
          _
      $region44: #{embeddings_forward.1} parent=5 // pred_fallthru
        _
    $region6: #{embeddings_forward.1} parent=1 // loop_footer
      %s17 = sadd.s32 1, %s13
    $region7: #{embeddings_forward.1} parent=1 // loop_footer_branch
      %12 = sbr.rel target = $region3
    $region8: #{embeddings_forward.1} parent=1 // loop_exit
      _
    %350 = vsyncpa [#allocation3], 1
    %s351 = scalar_lea.sflag [#allocation3], 1
    %352 = vsyncpa %s351, 1

</llo_original>
